<compile_context>
chip_gen: v5e
topology: v5e:2x2
jax: 0.10.0
libtpu: 0.0.40
codegen_flags: <defaults>
</compile_context>

<pallas_src>
import functools

import jax
import jax.numpy as jnp
from jax.experimental import pallas as pl
from jax.experimental.pallas import tpu as pltpu

EPS = 1e-5


def _fused_mlp_bn_relu(x, w1, w2, p1, p2, *, graphs, nodes, compute_dtype):
    """Fused Linear -> BN -> ReLU -> Linear -> BN -> ReLU on one row block.

    x  : [graphs*nodes, D_in]  (rows of `graphs` graphs stacked)
    w1 : [D_in, H]   w2 : [H, D_out]     (transposed vs. torch)
    p1 : [2, H]      rows = (gamma1, beta1)
    p2 : [2, D_out]  rows = (gamma2, beta2)

    Linear biases are intentionally absent: BN with batch statistics cancels a
    per-feature constant exactly.  BN stats are computed independently per
    graph (axis 1 after reshaping rows -> [graphs, nodes, F]); nodes == 8
    keeps that reshape tile-aligned (free).
    """
    g1, be1 = p1[0:1, :], p1[1:2, :]
    g2, be2 = p2[0:1, :], p2[1:2, :]
    inv_n = 1.0 / nodes
    rows = graphs * nodes

    # ---- MLP layer 1: Linear (bias cancelled) -> per-graph BN -> ReLU ----
    z1 = jnp.dot(x.astype(compute_dtype), w1.astype(compute_dtype),
                 preferred_element_type=jnp.float32)            # [rows, H] f32
    z1g = z1.reshape(graphs, nodes, z1.shape[-1])
    mu1 = jnp.sum(z1g, axis=1, keepdims=True) * inv_n            # [graphs,1,H]
    ex1 = jnp.sum(z1g * z1g, axis=1, keepdims=True) * inv_n
    var1 = jnp.maximum(ex1 - mu1 * mu1, 0.0)    # clamp: single-pass var can dip <0
    s1 = g1 * jax.lax.rsqrt(var1 + EPS)         # rsqrt -> EUP slot (free-ish)
    t1 = be1 - mu1 * s1
    h1 = jnp.maximum(z1g * s1 + t1, 0.0).reshape(rows, z1.shape[-1])

    # ---- MLP layer 2 (bias cancelled) + outer BatchNorm1d -> ReLU ----
    z2 = jnp.dot(h1.astype(compute_dtype), w2.astype(compute_dtype),
                 preferred_element_type=jnp.float32)            # [rows, D_out]
    z2g = z2.reshape(graphs, nodes, z2.shape[-1])
    mu2 = jnp.sum(z2g, axis=1, keepdims=True) * inv_n
    ex2 = jnp.sum(z2g * z2g, axis=1, keepdims=True) * inv_n
    var2 = jnp.maximum(ex2 - mu2 * mu2, 0.0)
    s2 = g2 * jax.lax.rsqrt(var2 + EPS)
    t2 = be2 - mu2 * s2
    return jnp.maximum(z2g * s2 + t2, 0.0).reshape(rows, z2.shape[-1])


def _kernel(h_ref, w1_ref, w2_ref, p1_ref, p2_ref, o_ref, *,
            graphs, nodes, compute_dtype):
    out = _fused_mlp_bn_relu(h_ref[...], w1_ref[...], w2_ref[...],
                             p1_ref[...], p2_ref[...],
                             graphs=graphs, nodes=nodes,
                             compute_dtype=compute_dtype)
    o_ref[...] = out.astype(o_ref.dtype)


def _pack_params(g1, be1, g2, be2):
    # Only gamma/beta survive; linear biases cancel against batch-stat BN.
    return (jnp.concatenate([g1, be1], axis=0),    # [2, H]
            jnp.concatenate([g2, be2], axis=0))    # [2, D_out]


def apply_node_func(h, w1, b1, g1, be1, w2, b2, g2, be2, *, use_bf16_matmul=False):
    """Single graph:  h [N, D_in] -> [N, D_out].  BN stats over all N rows.

    b1/b2 are accepted for API parity with the torch module but unused:
    batch-stat BatchNorm cancels per-feature biases exactly.
    """
    del b1, b2
    n, _ = h.shape
    d_out = w2.shape[1]
    p1, p2 = _pack_params(g1, be1, g2, be2)
    compute_dtype = jnp.bfloat16 if use_bf16_matmul else jnp.float32
    kernel = functools.partial(_kernel, graphs=1, nodes=n,
                               compute_dtype=compute_dtype)
    # TODO(synk): standalone, an 8x32 block is pure launch overhead; in a full
    # GIN layer fuse this with the preceding neighbor aggregation, or route
    # many graphs through apply_node_func_batched instead.
    return pl.pallas_call(
        kernel,
        out_shape=jax.ShapeDtypeStruct((n, d_out), jnp.float32),
        in_specs=[pl.BlockSpec(memory_space=pltpu.MemorySpace.VMEM)] * 5,
        out_specs=pl.BlockSpec(memory_space=pltpu.MemorySpace.VMEM),
    )(h, w1, w2, p1, p2)


def _pick_graphs_per_block(num_graphs, nodes_per_graph, target_rows=256):
    """Smallest graph block giving >=target_rows MXU rows while keeping >=2 grid steps."""
    divisors = [d for d in range(1, num_graphs + 1) if num_graphs % d == 0]
    cands = [d for d in divisors if num_graphs // d >= 2] or divisors
    big = [d for d in cands if d * nodes_per_graph >= target_rows]
    return min(big) if big else max(cands)


def apply_node_func_batched(h, w1, b1, g1, be1, w2, b2, g2, be2, *,
                            use_bf16_matmul=False, graphs_per_block=None):
    """Many graphs per call:  h [G, N, D_in] -> [G, N, D_out].

    Equivalent to applying the module independently to each graph's node block
    (BN stats per graph).  graphs_per_block graphs are packed per grid step so
    each matmul sees graphs_per_block*N rows (targets >=256 rows, v6e/v7x MXU
    native M), amortizing the fixed per-step overhead; the graph-block axis is
    a "parallel" grid axis (sharded across TensorCores on v7x).
    """
    del b1, b2                       # cancelled by batch-stat BN
    g, n, d_in = h.shape
    hdim = w1.shape[1]
    d_out = w2.shape[1]
    if graphs_per_block is None:
        graphs_per_block = _pick_graphs_per_block(g, n)
    assert g % graphs_per_block == 0, "num_graphs must divide by graphs_per_block"
    rows_per_block = graphs_per_block * n

    p1, p2 = _pack_params(g1, be1, g2, be2)
    compute_dtype = jnp.bfloat16 if use_bf16_matmul else jnp.float32
    # No wrapper-side casts: any bf16 conversion happens inside the kernel
    # (hides under the matmul; avoids an extra HBM round trip on h).

    # Flatten (G, N, D) -> (G*N, D): contiguous/free, and the kernel then sees
    # 2D slabs so loads/stores are long sublane runs.
    h2 = h.reshape(g * n, d_in)

    kernel = functools.partial(_kernel, graphs=graphs_per_block, nodes=n,
                               compute_dtype=compute_dtype)
    out2 = pl.pallas_call(
        kernel,
        out_shape=jax.ShapeDtypeStruct((g * n, d_out), jnp.float32),
        grid=(g // graphs_per_block,),
        in_specs=[
            # Per-step slab of graphs_per_block graphs' node rows.
            pl.BlockSpec((rows_per_block, d_in), lambda i: (i, 0)),
            # Weights / packed BN params: constant index_map -> fetched once,
            # no re-DMA across grid steps.
            pl.BlockSpec((d_in, hdim), lambda i: (0, 0)),
            pl.BlockSpec((hdim, d_out), lambda i: (0, 0)),
            pl.BlockSpec((2, hdim), lambda i: (0, 0)),
            pl.BlockSpec((2, d_out), lambda i: (0, 0)),
        ],
        out_specs=pl.BlockSpec((rows_per_block, d_out), lambda i: (i, 0)),
        compiler_params=pltpu.CompilerParams(
            dimension_semantics=("parallel",)),
    )(h2, w1, w2, p1, p2)
    # TODO(synk): D_out=32 (<128 lanes) keeps stores lane-masked; packing 4
    # graphs' features along lanes would make stores lane-dense but changes
    # the layout the downstream GIN consumer sees.
    return out2.reshape(g, n, d_out)


def _reference(h, w1, b1, g1, be1, w2, b2, g2, be2):
    """Faithful two-pass reference WITH biases (validates the cancellation)."""
    z1 = h @ w1 + b1
    mu1 = z1.mean(0, keepdims=True)
    v1 = ((z1 - mu1) ** 2).mean(0, keepdims=True)
    h1 = jnp.maximum((z1 - mu1) / jnp.sqrt(v1 + EPS) * g1 + be1, 0.0)
    z2 = h1 @ w2 + b2
    mu2 = z2.mean(0, keepdims=True)
    v2 = ((z2 - mu2) ** 2).mean(0, keepdims=True)
    return jnp.maximum((z2 - mu2) / jnp.sqrt(v2 + EPS) * g2 + be2, 0.0)


if __name__ == "__main__":
    # GIN-style dims: input_dim = output_dim = 32, hidden_dim = 64, N = 8 nodes.
    N, D_IN, H, D_OUT = 8, 32, 64, 32
    G = 64   # graphs per batched call -> 2 grid steps of 32 graphs (256 rows) each

    key = jax.random.PRNGKey(0)
    k_h, k_hb, k_w1, k_b1, k_w2, k_b2 = jax.random.split(key, 6)

    h = jax.random.normal(k_h, (N, D_IN), dtype=jnp.float32)
    h_batched = jax.random.normal(k_hb, (G, N, D_IN), dtype=jnp.float32)

    # Deterministic "torch-like" parameter init (uniform +- 1/sqrt(fan_in)).
    lim1 = 1.0 / (D_IN ** 0.5)
    w1 = jax.random.uniform(k_w1, (D_IN, H), jnp.float32, -lim1, lim1)
    b1 = jax.random.uniform(k_b1, (1, H), jnp.float32, -lim1, lim1)
    lim2 = 1.0 / (H ** 0.5)
    w2 = jax.random.uniform(k_w2, (H, D_OUT), jnp.float32, -lim2, lim2)
    b2 = jax.random.uniform(k_b2, (1, D_OUT), jnp.float32, -lim2, lim2)

    # BatchNorm affine params at PyTorch defaults (gamma=1, beta=0).
    g1 = jnp.ones((1, H), jnp.float32)
    be1 = jnp.zeros((1, H), jnp.float32)
    g2 = jnp.ones((1, D_OUT), jnp.float32)
    be2 = jnp.zeros((1, D_OUT), jnp.float32)

    params = (w1, b1, g1, be1, w2, b2, g2, be2)

    # --- single-graph, f32 matmuls (biases dropped in-kernel; math identical) ---
    out = jax.block_until_ready(apply_node_func(h, *params))
    ref = _reference(h, *params)
    assert out.shape == (N, D_OUT)
    assert jnp.allclose(out, ref, atol=1e-3, rtol=1e-3), "f32 mismatch vs reference"

    # --- batched: 32 graphs / 256 rows per grid step, 2 parallel steps ---
    out_b = jax.block_until_ready(apply_node_func_batched(h_batched, *params))
    ref_b = jnp.stack([_reference(h_batched[i], *params) for i in range(G)])
    assert out_b.shape == (G, N, D_OUT)
    assert jnp.allclose(out_b, ref_b, atol=1e-3, rtol=1e-3), "batched mismatch"

    # --- bf16 matmul operands (cast in-kernel, f32 accumulation/BN): loose check ---
    out_bf16 = jax.block_until_ready(
        apply_node_func_batched(h_batched, *params, use_bf16_matmul=True))
    assert float(jnp.max(jnp.abs(out_bf16 - ref_b))) < 0.25, "bf16 path diverged"

    print("KERNEL_OK")
</pallas_src>

<mosaic_0001>
module attributes {stable_mosaic.version = 11 : i64} {
  func.func @_kernel(%arg0: memref<8x32xf32, #tpu.memory_space<vmem>>, %arg1: memref<32x64xf32, #tpu.memory_space<vmem>>, %arg2: memref<64x32xf32, #tpu.memory_space<vmem>>, %arg3: memref<2x64xf32, #tpu.memory_space<vmem>>, %arg4: memref<2x32xf32, #tpu.memory_space<vmem>>, %arg5: memref<8x32xf32, #tpu.memory_space<vmem>>) attributes {dimension_semantics = [], scalar_prefetch = 0 : i64, scratch_operands = 0 : i64, tpu.core_type = #tpu.core_type<tc>} {
    %c0 = arith.constant 0 : index
    %c0_0 = arith.constant 0 : index
    %0 = vector.load %arg0[%c0, %c0_0] : memref<8x32xf32, #tpu.memory_space<vmem>>, vector<8x32xf32>
    %c0_1 = arith.constant 0 : index
    %c0_2 = arith.constant 0 : index
    %1 = vector.load %arg1[%c0_1, %c0_2] : memref<32x64xf32, #tpu.memory_space<vmem>>, vector<32x64xf32>
    %c0_3 = arith.constant 0 : index
    %c0_4 = arith.constant 0 : index
    %2 = vector.load %arg2[%c0_3, %c0_4] : memref<64x32xf32, #tpu.memory_space<vmem>>, vector<64x32xf32>
    %c0_5 = arith.constant 0 : index
    %c0_6 = arith.constant 0 : index
    %3 = vector.load %arg3[%c0_5, %c0_6] : memref<2x64xf32, #tpu.memory_space<vmem>>, vector<2x64xf32>
    %c0_7 = arith.constant 0 : index
    %c0_8 = arith.constant 0 : index
    %4 = vector.load %arg4[%c0_7, %c0_8] : memref<2x32xf32, #tpu.memory_space<vmem>>, vector<2x32xf32>
    %5 = vector.extract_strided_slice %3 {offsets = [0, 0], sizes = [1, 64], strides = [1, 1]} : vector<2x64xf32> to vector<1x64xf32>
    %6 = vector.extract_strided_slice %3 {offsets = [1, 0], sizes = [1, 64], strides = [1, 1]} : vector<2x64xf32> to vector<1x64xf32>
    %7 = vector.extract_strided_slice %4 {offsets = [0, 0], sizes = [1, 32], strides = [1, 1]} : vector<2x32xf32> to vector<1x32xf32>
    %8 = vector.extract_strided_slice %4 {offsets = [1, 0], sizes = [1, 32], strides = [1, 1]} : vector<2x32xf32> to vector<1x32xf32>
    %cst = arith.constant dense<0.000000e+00> : vector<8x64xf32>
    %9 = tpu.matmul %0, %1, %cst {dimension_numbers = #tpu.dot_dimension_numbers<[1], [0], [0], [1], [0, 0, 1, 1], [], []>} : vector<8x32xf32>, vector<32x64xf32>, vector<8x64xf32> -> vector<8x64xf32>
    %10 = vector.shape_cast %9 : vector<8x64xf32> to vector<1x8x64xf32>
    %cst_9 = arith.constant dense<0.000000e+00> : vector<1x64xf32>
    %11 = vector.multi_reduction <add>, %10, %cst_9 [1] : vector<1x8x64xf32> to vector<1x64xf32>
    %12 = vector.shape_cast %11 : vector<1x64xf32> to vector<1x1x64xf32>
    %cst_10 = arith.constant 1.250000e-01 : f32
    %13 = vector.broadcast %cst_10 : f32 to vector<1x1x64xf32>
    %14 = arith.mulf %12, %13 : vector<1x1x64xf32>
    %15 = arith.mulf %10, %10 : vector<1x8x64xf32>
    %cst_11 = arith.constant dense<0.000000e+00> : vector<1x64xf32>
    %16 = vector.multi_reduction <add>, %15, %cst_11 [1] : vector<1x8x64xf32> to vector<1x64xf32>
    %17 = vector.shape_cast %16 : vector<1x64xf32> to vector<1x1x64xf32>
    %cst_12 = arith.constant 1.250000e-01 : f32
    %18 = vector.broadcast %cst_12 : f32 to vector<1x1x64xf32>
    %19 = arith.mulf %17, %18 : vector<1x1x64xf32>
    %20 = arith.mulf %14, %14 : vector<1x1x64xf32>
    %21 = arith.subf %19, %20 : vector<1x1x64xf32>
    %cst_13 = arith.constant 0.000000e+00 : f32
    %22 = vector.broadcast %cst_13 : f32 to vector<1x1x64xf32>
    %23 = arith.maximumf %21, %22 : vector<1x1x64xf32>
    %cst_14 = arith.constant 9.99999974E-6 : f32
    %24 = vector.broadcast %cst_14 : f32 to vector<1x1x64xf32>
    %25 = arith.addf %23, %24 : vector<1x1x64xf32>
    %26 = math.rsqrt %25 : vector<1x1x64xf32>
    %27 = vector.shape_cast %5 : vector<1x64xf32> to vector<1x1x64xf32>
    %28 = arith.mulf %27, %26 : vector<1x1x64xf32>
    %29 = arith.mulf %14, %28 : vector<1x1x64xf32>
    %30 = vector.shape_cast %6 : vector<1x64xf32> to vector<1x1x64xf32>
    %31 = arith.subf %30, %29 : vector<1x1x64xf32>
    %32 = vector.broadcast %28 : vector<1x1x64xf32> to vector<1x8x64xf32>
    %33 = arith.mulf %10, %32 : vector<1x8x64xf32>
    %34 = vector.broadcast %31 : vector<1x1x64xf32> to vector<1x8x64xf32>
    %35 = arith.addf %33, %34 : vector<1x8x64xf32>
    %cst_15 = arith.constant 0.000000e+00 : f32
    %36 = vector.broadcast %cst_15 : f32 to vector<1x8x64xf32>
    %37 = arith.maximumf %35, %36 : vector<1x8x64xf32>
    %38 = vector.shape_cast %37 : vector<1x8x64xf32> to vector<8x64xf32>
    %cst_16 = arith.constant dense<0.000000e+00> : vector<8x32xf32>
    %39 = tpu.matmul %38, %2, %cst_16 {dimension_numbers = #tpu.dot_dimension_numbers<[1], [0], [0], [1], [0, 0, 1, 1], [], []>} : vector<8x64xf32>, vector<64x32xf32>, vector<8x32xf32> -> vector<8x32xf32>
    %40 = vector.shape_cast %39 : vector<8x32xf32> to vector<1x8x32xf32>
    %cst_17 = arith.constant dense<0.000000e+00> : vector<1x32xf32>
    %41 = vector.multi_reduction <add>, %40, %cst_17 [1] : vector<1x8x32xf32> to vector<1x32xf32>
    %42 = vector.shape_cast %41 : vector<1x32xf32> to vector<1x1x32xf32>
    %cst_18 = arith.constant 1.250000e-01 : f32
    %43 = vector.broadcast %cst_18 : f32 to vector<1x1x32xf32>
    %44 = arith.mulf %42, %43 : vector<1x1x32xf32>
    %45 = arith.mulf %40, %40 : vector<1x8x32xf32>
    %cst_19 = arith.constant dense<0.000000e+00> : vector<1x32xf32>
    %46 = vector.multi_reduction <add>, %45, %cst_19 [1] : vector<1x8x32xf32> to vector<1x32xf32>
    %47 = vector.shape_cast %46 : vector<1x32xf32> to vector<1x1x32xf32>
    %cst_20 = arith.constant 1.250000e-01 : f32
    %48 = vector.broadcast %cst_20 : f32 to vector<1x1x32xf32>
    %49 = arith.mulf %47, %48 : vector<1x1x32xf32>
    %50 = arith.mulf %44, %44 : vector<1x1x32xf32>
    %51 = arith.subf %49, %50 : vector<1x1x32xf32>
    %cst_21 = arith.constant 0.000000e+00 : f32
    %52 = vector.broadcast %cst_21 : f32 to vector<1x1x32xf32>
    %53 = arith.maximumf %51, %52 : vector<1x1x32xf32>
    %cst_22 = arith.constant 9.99999974E-6 : f32
    %54 = vector.broadcast %cst_22 : f32 to vector<1x1x32xf32>
    %55 = arith.addf %53, %54 : vector<1x1x32xf32>
    %56 = math.rsqrt %55 : vector<1x1x32xf32>
    %57 = vector.shape_cast %7 : vector<1x32xf32> to vector<1x1x32xf32>
    %58 = arith.mulf %57, %56 : vector<1x1x32xf32>
    %59 = arith.mulf %44, %58 : vector<1x1x32xf32>
    %60 = vector.shape_cast %8 : vector<1x32xf32> to vector<1x1x32xf32>
    %61 = arith.subf %60, %59 : vector<1x1x32xf32>
    %62 = vector.broadcast %58 : vector<1x1x32xf32> to vector<1x8x32xf32>
    %63 = arith.mulf %40, %62 : vector<1x8x32xf32>
    %64 = vector.broadcast %61 : vector<1x1x32xf32> to vector<1x8x32xf32>
    %65 = arith.addf %63, %64 : vector<1x8x32xf32>
    %cst_23 = arith.constant 0.000000e+00 : f32
    %66 = vector.broadcast %cst_23 : f32 to vector<1x8x32xf32>
    %67 = arith.maximumf %65, %66 : vector<1x8x32xf32>
    %68 = vector.shape_cast %67 : vector<1x8x32xf32> to vector<8x32xf32>
    %c0_24 = arith.constant 0 : index
    %c0_25 = arith.constant 0 : index
    %69 = vector.load %arg5[%c0_24, %c0_25] : memref<8x32xf32, #tpu.memory_space<vmem>>, vector<8x32xf32>
    tpu.vector_store %arg5[%c0_24, %c0_25], %68 {strides = array<i32>} : memref<8x32xf32, #tpu.memory_space<vmem>>, vector<8x32xf32>,
    return
  }
}

</mosaic_0001>

<llo_original>
// kernel: tpu_custom_call.1
$region0: #{tpu_custom_call.1}
  #allocation0 [shape = 'u32[]', space=smem, size = 0x4, offset = 0x4, fixed_abs, tag = 'smem constant byte address 0x4 - core index']
  #allocation1 [shape = 'u32[72,128]{1,0:T(1,128)}', space=vmem, size = 0x9000, scoped, tag = 'internal scratch']
  %s0 = inlined_call_operand.vmem [shape: f32[8,32], index: 0, kind: input, shape index: {}]
  %s1 = inlined_call_operand.vmem [shape: f32[32,64], index: 1, kind: input, shape index: {}]
  %s2 = inlined_call_operand.vmem [shape: f32[64,32], index: 2, kind: input, shape index: {}]
  %s3 = inlined_call_operand.vmem [shape: f32[2,64], index: 3, kind: input, shape index: {}]
  %s4 = inlined_call_operand.vmem [shape: f32[2,32], index: 4, kind: input, shape index: {}]
  %s5 = inlined_call_operand.hbm [shape: f32[8,32], index: 5, kind: output, shape index: {}]
  %s6 = sld [smem:[#allocation0]]
  $region30: #{tpu_custom_call.1} parent=0
    _
  %s8 = ssub.s32 1, %s6
  %s9 = scalar_select 0, %s8, %s6
  $region1: #{tpu_custom_call.1} parent=0
    #allocation2 [shape = 'u8[4096]{0}', space=vmem, size = 0x1000, scoped, tag = 'output window, operand 0, single buffered']
    #allocation3 [shape = 's32[1]{0}', space=sflag, size = 0x4, scoped, tag = 'scoped memory for tpu_custom_call.1']
    %10 = vsyncpa [#allocation3], 0
    // Predicated region
    $region2: #{tpu_custom_call.1} parent=1 // pred_check
      _
    $region3: #{tpu_custom_call.1} parent=1 // pred_check_branch
      %12 = sbr.rel (0) target = $region5
    $region4: #{tpu_custom_call.1} parent=1 // pred_region
      _
    $region5: #{tpu_custom_call.1} parent=1 // pred_fallthru
      _
    // Predicated region
    $region6: #{tpu_custom_call.1} parent=1 // pred_check
      _
    $region7: #{tpu_custom_call.1} parent=1 // pred_check_branch
      %14 = sbr.rel (0) target = $region9
    $region8: #{tpu_custom_call.1} parent=1 // pred_region
      _
    $region9: #{tpu_custom_call.1} parent=1 // pred_fallthru
      _
    // Predicated region
    $region10: #{tpu_custom_call.1} parent=1 // pred_check
      _
    $region11: #{tpu_custom_call.1} parent=1 // pred_check_branch
      %16 = sbr.rel (0) target = $region13
    $region12: #{tpu_custom_call.1} parent=1 // pred_region
      _
    $region13: #{tpu_custom_call.1} parent=1 // pred_fallthru
      _
    // Predicated region
    $region14: #{tpu_custom_call.1} parent=1 // pred_check
      _
    $region15: #{tpu_custom_call.1} parent=1 // pred_check_branch
      %18 = sbr.rel (0) target = $region17
    $region16: #{tpu_custom_call.1} parent=1 // pred_region
      _
    $region17: #{tpu_custom_call.1} parent=1 // pred_fallthru
      _
    // Predicated region
    $region18: #{tpu_custom_call.1} parent=1 // pred_check
      _
    $region19: #{tpu_custom_call.1} parent=1 // pred_check_branch
      %20 = sbr.rel (0) target = $region21
    $region20: #{tpu_custom_call.1} parent=1 // pred_region
      _
    $region21: #{tpu_custom_call.1} parent=1 // pred_fallthru
      _
    %v21 = vld [vmem:[%s0] sm:$0xff]
    %v22 = vld [vmem:[%s1] sm:$0xff]
    %v23 = vld [vmem:[%s1 + $0x8] sm:$0xff]
    %v24 = vld [vmem:[%s1 + $0x10] sm:$0xff]
    %v25 = vld [vmem:[%s1 + $0x18] sm:$0xff]
    %v26 = vld [vmem:[%s2] sm:$0xff]
    %v27 = vld [vmem:[%s2 + $0x8] sm:$0xff]
    %v28 = vld [vmem:[%s2 + $0x10] sm:$0xff]
    %v29 = vld [vmem:[%s2 + $0x18] sm:$0xff]
    %v30 = vld [vmem:[%s2 + $0x20] sm:$0xff]
    %v31 = vld [vmem:[%s2 + $0x28] sm:$0xff]
    %v32 = vld [vmem:[%s2 + $0x30] sm:$0xff]
    %v33 = vld [vmem:[%s2 + $0x38] sm:$0xff]
    %v34 = vld [vmem:[%s3] sm:$0x3]
    %v35 = vld [vmem:[%s4] sm:$0x3]
    %vm36 = vcmask 261120
    %v38 = vsel %vm36, %v21, 0
    %40 = vmatpush.msra.mxu0 0.0
    %41 = vmatpush.msra.mxu0 0.0
    %42 = vmatpush.msra.mxu0 0.0
    %43 = vmatpush.msra.mxu0 0.0
    %44 = vmatpush.msra.mxu0 0.0
    %45 = vmatpush.msra.mxu0 0.0
    %46 = vmatpush.msra.mxu0 0.0
    %47 = vmatpush.msra.mxu0 0.0
    %48 = vmatpush.msra.mxu0 0.0
    %49 = vmatpush.msra.mxu0 0.0
    %50 = vmatpush.msra.mxu0 0.0
    %51 = vmatpush.msra.mxu0 0.0
    %52 = vmatpush.msra.mxu0 %v25
    %53 = vmatpush.msra.mxu0 %v24
    %54 = vmatpush.msra.mxu0 %v23
    %55 = vmatpush.msra.mxu0 %v22
    %56 = vmatmul.f32.gmra.mxu0 %v38
    %v57 = vpop.f32.mrf.mxu0
    %v58 = vadd.f32 0.0, %v57
    %59 = vdwg.mxu0
    %vm60 = vcmask 523264
    %v61 = vsel %vm60, %v58, 0.0
    %v62 = vrot.slane %v61, 4
    %v63 = vadd.f32 %v61, %v62
    %v64 = vrot.slane %v63, 2
    %v65 = vadd.f32 %v63, %v64
    %v66 = vrot.slane %v65, 1
    %v67 = vadd.f32 %v65, %v66
    %v68 = vmul.f32 %v67, 0.125
    %v69 = vmul.f32 %v58, %v58
    %v70 = vsel %vm60, %v69, 0.0
    %v71 = vrot.slane %v70, 4
    %v72 = vadd.f32 %v70, %v71
    %v73 = vrot.slane %v72, 2
    %v74 = vadd.f32 %v72, %v73
    %v75 = vrot.slane %v74, 1
    %v76 = vadd.f32 %v74, %v75
    %v77 = vmul.f32 %v76, 0.125
    %v78 = vmul.f32 %v68, %v68
    %v79 = vsub.f32 %v77, %v78
    %v80 = vmax.f32 %v79, 0.0
    %v81 = vadd.f32 %v80, 1e-05
    %v82 = vrsqrt.pop %v81
    %v83 = vmul.f32 %v82, %v81
    %v84 = vmul.f32 %v83, %v82
    %v85 = vmul.f32 0.5, %v84
    %v86 = vsub.f32 1.5, %v85
    %v87 = vmul.f32 %v82, %v86
    %vm88 = vweird.f32 %v81
    %vm89 = vweird.f32 %v82
    %vm90 = vmor %vm88, %vm89
    %v91 = vsel %vm90, %v82, %v87
    %v92 = vmul.f32 %v34, %v91
    %v93 = vmul.f32 %v68, %v92
    %v95 = vrot.slane %v93, 7
    %v97 = vsub.f32 %v34, %v95
    %v98 = vperm.slane %v92, 0
    %v99 = vmul.f32 %v58, %v98
    %v100 = vperm.slane %v97, 1
    %v101 = vadd.f32 %v99, %v100
    %v102 = vmax.f32 %v101, 0.0
    %v104 = vsel %vm60, %v102, 0
    %106 = vmatpush.msra.mxu0 0.0
    %107 = vmatpush.msra.mxu0 0.0
    %108 = vmatpush.msra.mxu0 0.0
    %109 = vmatpush.msra.mxu0 0.0
    %110 = vmatpush.msra.mxu0 0.0
    %111 = vmatpush.msra.mxu0 0.0
    %112 = vmatpush.msra.mxu0 0.0
    %113 = vmatpush.msra.mxu0 0.0
    %114 = vmatpush.msra.mxu0 %v33
    %115 = vmatpush.msra.mxu0 %v32
    %116 = vmatpush.msra.mxu0 %v31
    %117 = vmatpush.msra.mxu0 %v30
    %118 = vmatpush.msra.mxu0 %v29
    %119 = vmatpush.msra.mxu0 %v28
    %120 = vmatpush.msra.mxu0 %v27
    %121 = vmatpush.msra.mxu0 %v26
    %122 = vmatmul.f32.gmra.mxu0 %v104
    %v123 = vpop.f32.mrf.mxu0
    %v124 = vadd.f32 0.0, %v123
    %125 = vdwg.mxu0
    %v126 = vsel %vm36, %v124, 0.0
    %v127 = vrot.slane %v126, 4
    %v128 = vadd.f32 %v126, %v127
    %v129 = vrot.slane %v128, 2
    %v130 = vadd.f32 %v128, %v129
    %v131 = vrot.slane %v130, 1
    %v132 = vadd.f32 %v130, %v131
    %v133 = vmul.f32 %v132, 0.125
    %v134 = vmul.f32 %v124, %v124
    %v135 = vsel %vm36, %v134, 0.0
    %v136 = vrot.slane %v135, 4
    %v137 = vadd.f32 %v135, %v136
    %v138 = vrot.slane %v137, 2
    %v139 = vadd.f32 %v137, %v138
    %v140 = vrot.slane %v139, 1
    %v141 = vadd.f32 %v139, %v140
    %v142 = vmul.f32 %v141, 0.125
    %v143 = vmul.f32 %v133, %v133
    %v144 = vsub.f32 %v142, %v143
    %v145 = vmax.f32 %v144, 0.0
    %v146 = vadd.f32 %v145, 1e-05
    %v147 = vrsqrt.pop %v146
    %v148 = vmul.f32 %v147, %v146
    %v149 = vmul.f32 %v148, %v147
    %v150 = vmul.f32 0.5, %v149
    %v151 = vsub.f32 1.5, %v150
    %v152 = vmul.f32 %v147, %v151
    %vm153 = vweird.f32 %v146
    %vm154 = vweird.f32 %v147
    %vm155 = vmor %vm153, %vm154
    %v156 = vsel %vm155, %v147, %v152
    %v157 = vmul.f32 %v35, %v156
    %v158 = vmul.f32 %v133, %v157
    %v160 = vrot.slane %v158, 7
    %v162 = vsub.f32 %v35, %v160
    %v163 = vperm.slane %v157, 0
    %v164 = vmul.f32 %v124, %v163
    %v165 = vperm.slane %v162, 1
    %v166 = vadd.f32 %v164, %v165
    %v167 = vmax.f32 %v166, 0.0
    %168 = vst.msk [vmem:[#allocation2] sm:$0xff] %vm36, %v167
    // Predicated region
    $region22: #{tpu_custom_call.1} parent=1 // pred_check
      _
    $region23: #{tpu_custom_call.1} parent=1 // pred_check_branch
      %170 = sbr.rel (0) target = $region25
    $region24: #{tpu_custom_call.1} parent=1 // pred_region
      %172 = vsyncadd [#allocation3], 0
      %s174 = sshll.u32 [#allocation2], 4
      %s175 = int_to_ptr.vmem [resolvable:$true] %s174
      %s176 = sshll.u32 %s5, 4
      %s177 = int_to_ptr.hbm [resolvable:$true] %s176
      %179 = dma.vmem_to_hbm [thread:$0]  %s175, 128, %s177, [#allocation3]
    $region25: #{tpu_custom_call.1} parent=1 // pred_fallthru
      _
    // Predicated region
    $region26: #{tpu_custom_call.1} parent=1 // pred_check
      _
    $region27: #{tpu_custom_call.1} parent=1 // pred_check_branch
      %181 = sbr.rel (0) target = $region29
    $region28: #{tpu_custom_call.1} parent=1 // pred_region
      %183 = dma.done [#allocation3], 128
    $region29: #{tpu_custom_call.1} parent=1 // pred_fallthru
      _
    %184 = vsyncpa [#allocation3], 1

</llo_original>
